<compile_context>
chip_gen: v5e
topology: v5e:2x2
jax: 0.10.0
libtpu: 0.0.40
codegen_flags: <defaults>
</compile_context>

<pallas_src>
import functools

import jax
import jax.numpy as jnp
from jax.experimental import pallas as pl
from jax.experimental.pallas import tpu as pltpu

_LANE = 128
_SUBLANE = 8


def _round_up(n, m):
    return (n + m - 1) // m * m


# --------------------------------- kernel ------------------------------------


def _fused_mlp_kernel(x_ref, *refs, num_hidden, compute_dtype):
    """Fused MLP: (num_hidden x [linear+relu]) -> linear -> log_softmax.

    refs = (w0, b0, w1, b1, ..., w_out, b_out, o_ref).  Weights are (in, out) in
    `compute_dtype`; biases are (1, out) f32 (the output-layer bias carries -inf in
    padded columns, which masks them out of the softmax normalizer for free).
    """
    o_ref = refs[-1]
    wb = refs[:-1]

    h = x_ref[...]                                   # (tile_m, d0) compute_dtype
    for i in range(num_hidden + 1):
        w = wb[2 * i][...]
        b = wb[2 * i + 1][...]                       # (1, d_out) f32, broadcasts
        z = jnp.dot(h, w, preferred_element_type=jnp.float32) + b
        if i < num_hidden:
            # f32 epilogue (relu); cast only at the MXU boundary of the next layer.
            h = jnp.maximum(z, 0.0).astype(compute_dtype)
            # dropout: identity in eval mode
        else:
            # Padded logit columns already hold -inf (folded into the bias), so the
            # row max is finite and exp(-inf) = 0 keeps the normalizer exact.
            m = jnp.max(z, axis=-1, keepdims=True)
            s = z - m
            lse = jnp.log(jnp.sum(jnp.exp(s), axis=-1, keepdims=True))
            o_ref[...] = (s - lse).astype(o_ref.dtype)


# -------------------- one-time parameter preparation --------------------------


def prepare_params(hidden_params, out_params, *, compute_dtype=jnp.bfloat16):
    """Pad / transpose-free / cast parameters ONCE (hoisted out of the call path).

    hidden_params: list of (W, b) with W already (in, out); b is (out,)
    out_params:    (W_out, b_out) same convention
    compute_dtype: dtype of the MXU matmul inputs (bf16 default; f32 for exactness).
    """
    all_params = list(hidden_params) + [out_params]
    in_f = all_params[0][0].shape[0]
    out_f = all_params[-1][0].shape[1]
    feat = [in_f] + [w.shape[1] for (w, _) in all_params]
    feat_p = [_round_up(f, _LANE) for f in feat]     # lane-dense feature dims

    flat = []
    n_layers = len(all_params)
    for i, (w, b) in enumerate(all_params):
        din, dout = w.shape
        wp = jnp.pad(w.astype(jnp.float32),
                     ((0, feat_p[i] - din), (0, feat_p[i + 1] - dout)))
        last = (i == n_layers - 1)
        # Hidden-layer padding stays exactly 0 through ReLU.  The output layer folds
        # the padded-column mask into its bias (-inf) so the kernel needs no iota/where.
        pad_val = float("-inf") if last else 0.0
        bp = jnp.pad(b.astype(jnp.float32), (0, feat_p[i + 1] - dout),
                     constant_values=pad_val)
        flat.append(wp.astype(compute_dtype))                 # MXU operand
        flat.append(bp.reshape(1, feat_p[i + 1]))             # f32 epilogue operand
    flat = [jax.block_until_ready(a) for a in flat]           # materialize once

    return dict(
        flat=tuple(flat),
        feat_p=tuple(feat_p),
        num_hidden=len(hidden_params),
        in_features=in_f,
        out_features=out_f,
        compute_dtype=compute_dtype,
    )


# --------------------------------- wrapper ------------------------------------


def classifier_forward(x, params, *, block_m=512):
    """Forward pass equivalent to Classifier.forward (eval mode).

    x:       (batch, in_features) f32
    params:  output of prepare_params (pre-padded, pre-cast)
    block_m: upper bound on the batch tile (512 amortizes grid-step overhead and
             reaches ~85% of HBM roofline for the streamed x/out tiles).
    """
    flat = params["flat"]
    feat_p = params["feat_p"]
    num_hidden = params["num_hidden"]
    in_f = params["in_features"]
    out_f = params["out_features"]
    compute_dtype = params["compute_dtype"]

    batch = x.shape[0]

    # Batch tiling: tile_m adaptive (multiple of 8) so padding waste is bounded;
    # force a >= 2-step (even) parallel grid when the batch allows so v7x's two
    # TensorCores both get work (negligible overhead on single-TC v5e/v6e).
    batch_p8 = _round_up(batch, _SUBLANE)
    num_m = pl.cdiv(batch_p8, block_m)
    if batch_p8 >= 2 * _SUBLANE:
        num_m = max(num_m, 2)
        if num_m % 2:
            num_m += 1
    tile_m = _round_up(pl.cdiv(batch_p8, num_m), _SUBLANE)
    batch_p = num_m * tile_m

    # Only the input needs per-call padding (runtime data); weights are pre-padded.
    x_p = jnp.pad(x, ((0, batch_p - batch), (0, feat_p[0] - in_f))).astype(compute_dtype)

    kernel = functools.partial(
        _fused_mlp_kernel, num_hidden=num_hidden, compute_dtype=compute_dtype)
    out_shape = jax.ShapeDtypeStruct((batch_p, feat_p[-1]), jnp.float32)

    # Explicit VMEM budget: resident weights/biases (assume double-buffered for the
    # fallback path) + pipelined x/out tiles + activation scratch, +25% headroom.
    wdt = jnp.dtype(compute_dtype).itemsize
    weight_bytes = sum(feat_p[i] * feat_p[i + 1] * wdt + feat_p[i + 1] * 4
                       for i in range(num_hidden + 1))
    io_bytes = 2 * tile_m * feat_p[0] * wdt + 2 * tile_m * feat_p[-1] * 4
    act_bytes = 2 * tile_m * max(feat_p) * 4
    footprint = 2 * weight_bytes + io_bytes + act_bytes
    vmem_limit = max(int(footprint * 1.25) + (2 << 20), 32 << 20)
    vmem_limit = min(vmem_limit, 100 << 20)

    if num_m == 1:
        # Entire problem is one VMEM-resident block: no grid, no pipeline bookkeeping.
        out_p = pl.pallas_call(
            kernel, out_shape=out_shape,
            compiler_params=pltpu.CompilerParams(vmem_limit_bytes=vmem_limit),
        )(x_p, *flat)
    else:
        def build_call(single_buffer_weights):
            in_specs = [pl.BlockSpec((tile_m, feat_p[0]), lambda m: (m, 0))]
            for i in range(num_hidden + 1):
                din, dout = feat_p[i], feat_p[i + 1]
                kw = {}
                if single_buffer_weights:
                    # Constant-index weights never change block; single-buffering
                    # halves their VMEM footprint (key on v7x's 64 MiB VMEM).
                    kw = dict(pipeline_mode=pl.Buffered(1))
                in_specs.append(pl.BlockSpec((din, dout), lambda m: (0, 0), **kw))
                in_specs.append(pl.BlockSpec((1, dout), lambda m: (0, 0), **kw))
            return pl.pallas_call(
                kernel,
                out_shape=out_shape,
                grid=(num_m,),
                in_specs=in_specs,
                out_specs=pl.BlockSpec((tile_m, feat_p[-1]), lambda m: (m, 0)),
                compiler_params=pltpu.CompilerParams(
                    dimension_semantics=("parallel",),
                    vmem_limit_bytes=vmem_limit,
                ),
            )

        try:
            out_p = build_call(True)(x_p, *flat)
        except Exception:
            # Fallback for jax versions without pipeline_mode / Buffered(1) support:
            # default double-buffered specs (still correct, slightly more VMEM).
            out_p = build_call(False)(x_p, *flat)

    return out_p[:batch, :out_f]


# ------------------------- parameter construction ----------------------------


def init_params(key, in_features, out_features, hidden_layers):
    """Deterministic init mimicking nn.Linear's U(-1/sqrt(fan_in), 1/sqrt(fan_in)).

    Weights are stored already transposed as (in, out).
    """
    sizes = [in_features] + list(hidden_layers)
    hidden_params = []
    for h1, h2 in zip(sizes[:-1], sizes[1:]):
        key, kw, kb = jax.random.split(key, 3)
        bound = 1.0 / jnp.sqrt(h1)
        w = jax.random.uniform(kw, (h1, h2), jnp.float32, -bound, bound)
        b = jax.random.uniform(kb, (h2,), jnp.float32, -bound, bound)
        hidden_params.append((w, b))
    key, kw, kb = jax.random.split(key, 3)
    bound = 1.0 / jnp.sqrt(sizes[-1])
    w_out = jax.random.uniform(kw, (sizes[-1], out_features), jnp.float32, -bound, bound)
    b_out = jax.random.uniform(kb, (out_features,), jnp.float32, -bound, bound)
    return hidden_params, (w_out, b_out)


# -------------------------------- reference ----------------------------------


def classifier_forward_ref(x, hidden_params, out_params):
    for (w, b) in hidden_params:
        x = jnp.maximum(x @ w + b, 0.0)
    w_out, b_out = out_params
    z = x @ w_out + b_out
    return jax.nn.log_softmax(z, axis=1)


# ---------------------------------- main -------------------------------------

if __name__ == "__main__":
    key = jax.random.PRNGKey(0)

    batch = 8
    in_features = 64
    hidden_layers = [128, 32]
    out_features = 16

    key, kx, kp = jax.random.split(key, 3)
    x = jax.random.normal(kx, (batch, in_features), jnp.float32)
    hidden_params, out_params = init_params(kp, in_features, out_features, hidden_layers)
    y_ref = classifier_forward_ref(x, hidden_params, out_params)

    key, kx2 = jax.random.split(key)
    x_big = jax.random.normal(kx2, (300, in_features), jnp.float32)
    y_big_ref = classifier_forward_ref(x_big, hidden_params, out_params)

    # 1) f32 exactness check: small batch -> single VMEM-resident block (no grid).
    params_f32 = prepare_params(hidden_params, out_params, compute_dtype=jnp.float32)
    y = jax.block_until_ready(classifier_forward(x, params_f32))
    assert y.shape == (batch, out_features)
    assert jnp.allclose(y, y_ref, atol=1e-5, rtol=1e-5), (
        f"max abs err (f32 single-block) = {jnp.max(jnp.abs(y - y_ref))}"
    )
    assert jnp.allclose(jnp.sum(jnp.exp(y), axis=1), 1.0, atol=1e-5)

    # 2) f32, batch-tiled "parallel" grid path (non-multiple batch exercises padding
    #    and the forced >=2-step grid for v7x megacore).
    y_big = jax.block_until_ready(classifier_forward(x_big, params_f32))
    assert y_big.shape == (300, out_features)
    assert jnp.allclose(y_big, y_big_ref, atol=1e-5, rtol=1e-5), (
        f"max abs err (f32 tiled) = {jnp.max(jnp.abs(y_big - y_big_ref))}"
    )

    # 3) Default bf16 matmul inputs (f32 accumulation + f32 epilogue).
    params_bf16 = prepare_params(hidden_params, out_params)   # bf16 default
    y_bf16 = jax.block_until_ready(classifier_forward(x_big, params_bf16))
    assert jnp.allclose(y_bf16, y_big_ref, atol=5e-2), (
        f"max abs err (bf16 tiled) = {jnp.max(jnp.abs(y_bf16 - y_big_ref))}"
    )
    y_bf16_small = jax.block_until_ready(classifier_forward(x, params_bf16))
    assert jnp.allclose(y_bf16_small, y_ref, atol=5e-2), (
        f"max abs err (bf16 single-block) = {jnp.max(jnp.abs(y_bf16_small - y_ref))}"
    )

    print("KERNEL_OK")
</pallas_src>

<mosaic_0001>
module attributes {stable_mosaic.version = 11 : i64} {
  func.func @_fused_mlp_kernel(%arg0: memref<8x128xf32, #tpu.memory_space<vmem>>, %arg1: memref<128x128xf32, #tpu.memory_space<vmem>>, %arg2: memref<1x128xf32, #tpu.memory_space<vmem>>, %arg3: memref<128x128xf32, #tpu.memory_space<vmem>>, %arg4: memref<1x128xf32, #tpu.memory_space<vmem>>, %arg5: memref<128x128xf32, #tpu.memory_space<vmem>>, %arg6: memref<1x128xf32, #tpu.memory_space<vmem>>, %arg7: memref<8x128xf32, #tpu.memory_space<vmem>>) attributes {dimension_semantics = [], scalar_prefetch = 0 : i64, scratch_operands = 0 : i64, tpu.core_type = #tpu.core_type<tc>} {
    %c0 = arith.constant 0 : index
    %c0_0 = arith.constant 0 : index
    %0 = vector.load %arg0[%c0, %c0_0] : memref<8x128xf32, #tpu.memory_space<vmem>>, vector<8x128xf32>
    %c0_1 = arith.constant 0 : index
    %c0_2 = arith.constant 0 : index
    %1 = vector.load %arg1[%c0_1, %c0_2] : memref<128x128xf32, #tpu.memory_space<vmem>>, vector<128x128xf32>
    %c0_3 = arith.constant 0 : index
    %c0_4 = arith.constant 0 : index
    %2 = vector.load %arg2[%c0_3, %c0_4] : memref<1x128xf32, #tpu.memory_space<vmem>>, vector<1x128xf32>
    %cst = arith.constant dense<0.000000e+00> : vector<8x128xf32>
    %3 = tpu.matmul %0, %1, %cst {dimension_numbers = #tpu.dot_dimension_numbers<[1], [0], [0], [1], [0, 0, 1, 1], [], []>} : vector<8x128xf32>, vector<128x128xf32>, vector<8x128xf32> -> vector<8x128xf32>
    %4 = vector.broadcast %2 : vector<1x128xf32> to vector<8x128xf32>
    %5 = arith.addf %3, %4 : vector<8x128xf32>
    %cst_5 = arith.constant 0.000000e+00 : f32
    %6 = vector.broadcast %cst_5 : f32 to vector<8x128xf32>
    %7 = arith.maximumf %5, %6 : vector<8x128xf32>
    %c0_6 = arith.constant 0 : index
    %c0_7 = arith.constant 0 : index
    %8 = vector.load %arg3[%c0_6, %c0_7] : memref<128x128xf32, #tpu.memory_space<vmem>>, vector<128x128xf32>
    %c0_8 = arith.constant 0 : index
    %c0_9 = arith.constant 0 : index
    %9 = vector.load %arg4[%c0_8, %c0_9] : memref<1x128xf32, #tpu.memory_space<vmem>>, vector<1x128xf32>
    %cst_10 = arith.constant dense<0.000000e+00> : vector<8x128xf32>
    %10 = tpu.matmul %7, %8, %cst_10 {dimension_numbers = #tpu.dot_dimension_numbers<[1], [0], [0], [1], [0, 0, 1, 1], [], []>} : vector<8x128xf32>, vector<128x128xf32>, vector<8x128xf32> -> vector<8x128xf32>
    %11 = vector.broadcast %9 : vector<1x128xf32> to vector<8x128xf32>
    %12 = arith.addf %10, %11 : vector<8x128xf32>
    %cst_11 = arith.constant 0.000000e+00 : f32
    %13 = vector.broadcast %cst_11 : f32 to vector<8x128xf32>
    %14 = arith.maximumf %12, %13 : vector<8x128xf32>
    %c0_12 = arith.constant 0 : index
    %c0_13 = arith.constant 0 : index
    %15 = vector.load %arg5[%c0_12, %c0_13] : memref<128x128xf32, #tpu.memory_space<vmem>>, vector<128x128xf32>
    %c0_14 = arith.constant 0 : index
    %c0_15 = arith.constant 0 : index
    %16 = vector.load %arg6[%c0_14, %c0_15] : memref<1x128xf32, #tpu.memory_space<vmem>>, vector<1x128xf32>
    %cst_16 = arith.constant dense<0.000000e+00> : vector<8x128xf32>
    %17 = tpu.matmul %14, %15, %cst_16 {dimension_numbers = #tpu.dot_dimension_numbers<[1], [0], [0], [1], [0, 0, 1, 1], [], []>} : vector<8x128xf32>, vector<128x128xf32>, vector<8x128xf32> -> vector<8x128xf32>
    %18 = vector.broadcast %16 : vector<1x128xf32> to vector<8x128xf32>
    %19 = arith.addf %17, %18 : vector<8x128xf32>
    %cst_17 = arith.constant dense<0xFF800000> : vector<8xf32>
    %20 = vector.multi_reduction <maximumf>, %19, %cst_17 [1] : vector<8x128xf32> to vector<8xf32>
    %21 = vector.shape_cast %20 : vector<8xf32> to vector<8x1xf32>
    %22 = vector.broadcast %21 : vector<8x1xf32> to vector<8x128xf32>
    %23 = arith.subf %19, %22 : vector<8x128xf32>
    %24 = math.exp %23 : vector<8x128xf32>
    %cst_18 = arith.constant dense<0.000000e+00> : vector<8xf32>
    %25 = vector.multi_reduction <add>, %24, %cst_18 [1] : vector<8x128xf32> to vector<8xf32>
    %26 = vector.shape_cast %25 : vector<8xf32> to vector<8x1xf32>
    %27 = math.log %26 : vector<8x1xf32>
    %28 = vector.broadcast %27 : vector<8x1xf32> to vector<8x128xf32>
    %29 = arith.subf %23, %28 : vector<8x128xf32>
    %c0_19 = arith.constant 0 : index
    %c0_20 = arith.constant 0 : index
    %30 = vector.load %arg7[%c0_19, %c0_20] : memref<8x128xf32, #tpu.memory_space<vmem>>, vector<8x128xf32>
    tpu.vector_store %arg7[%c0_19, %c0_20], %29 {strides = array<i32>} : memref<8x128xf32, #tpu.memory_space<vmem>>, vector<8x128xf32>,
    return
  }
}

</mosaic_0001>

<llo_original>
// kernel: tpu_custom_call.1
$region0: #{tpu_custom_call.1}
  #allocation0 [shape = 'u32[]', space=smem, size = 0x4, offset = 0x4, fixed_abs, tag = 'smem constant byte address 0x4 - core index']
  #allocation1 [shape = 'u32[72,128]{1,0:T(1,128)}', space=vmem, size = 0x9000, scoped, tag = 'internal scratch']
  %s0 = inlined_call_operand.hbm [shape: f32[8,128], index: 0, kind: input, shape index: {}]
  %s1 = inlined_call_operand.hbm [shape: f32[128,128], index: 1, kind: input, shape index: {}]
  %s2 = inlined_call_operand.vmem [shape: f32[1,128], index: 2, kind: input, shape index: {}]
  %s3 = inlined_call_operand.hbm [shape: f32[128,128], index: 3, kind: input, shape index: {}]
  %s4 = inlined_call_operand.vmem [shape: f32[1,128], index: 4, kind: input, shape index: {}]
  %s5 = inlined_call_operand.hbm [shape: f32[128,128], index: 5, kind: input, shape index: {}]
  %s6 = inlined_call_operand.vmem [shape: f32[1,128], index: 6, kind: input, shape index: {}]
  %s7 = inlined_call_operand.hbm [shape: f32[8,128], index: 7, kind: output, shape index: {}]
  %s8 = sld [smem:[#allocation0]]
  $region54: #{tpu_custom_call.1} parent=0
    _
  %s10 = ssub.s32 1, %s8
  %s11 = scalar_select 0, %s10, %s8
  $region1: #{tpu_custom_call.1} parent=0
    #allocation2 [shape = 'u8[4096]{0}', space=vmem, size = 0x1000, scoped, tag = 'input window, operand 0, single buffered']
    #allocation3 [shape = 's32[1]{0}', space=sflag, size = 0x4, scoped, tag = 'scoped memory for tpu_custom_call.1']
    #allocation4 [shape = 's32[1]{0}', space=sflag, size = 0x4, scoped, tag = 'scoped memory for tpu_custom_call.1']
    #allocation5 [shape = 'u8[65536]{0}', space=vmem, size = 0x10000, scoped, tag = 'input window, operand 1, single buffered']
    #allocation6 [shape = 's32[1]{0}', space=sflag, size = 0x4, scoped, tag = 'scoped memory for tpu_custom_call.1']
    #allocation7 [shape = 'u8[65536]{0}', space=vmem, size = 0x10000, scoped, tag = 'input window, operand 3, single buffered']
    #allocation8 [shape = 'u8[65536]{0}', space=vmem, size = 0x10000, scoped, tag = 'input window, operand 5, single buffered']
    #allocation9 [shape = 's32[1]{0}', space=sflag, size = 0x4, scoped, tag = 'scoped memory for tpu_custom_call.1']
    #allocation10 [shape = 'u8[4096]{0}', space=vmem, size = 0x1000, scoped, tag = 'output window, operand 0, single buffered']
    %12 = vsyncpa [#allocation3], 0
    %13 = vsyncpa [#allocation6], 0
    %14 = vsyncpa [#allocation9], 0
    %15 = vsyncpa [#allocation4], 0
    // Predicated region
    $region2: #{tpu_custom_call.1} parent=1 // pred_check
      _
    $region3: #{tpu_custom_call.1} parent=1 // pred_check_branch
      %17 = sbr.rel (0) target = $region5
    $region4: #{tpu_custom_call.1} parent=1 // pred_region
      %19 = vsyncadd [#allocation3], 0
      %s21 = sshll.u32 %s0, 4
      %s22 = int_to_ptr.hbm [resolvable:$true] %s21
      %s23 = sshll.u32 [#allocation2], 4
      %s24 = int_to_ptr.vmem [resolvable:$true] %s23
      %26 = dma.hbm_to_vmem [thread:$0]  %s22, 128, %s24, [#allocation3]
    $region5: #{tpu_custom_call.1} parent=1 // pred_fallthru
      _
    // Predicated region
    $region6: #{tpu_custom_call.1} parent=1 // pred_check
      _
    $region7: #{tpu_custom_call.1} parent=1 // pred_check_branch
      %28 = sbr.rel (0) target = $region9
    $region8: #{tpu_custom_call.1} parent=1 // pred_region
      %30 = vsyncadd [#allocation6], 0
      %s31 = sshll.u32 %s1, 4
      %s32 = int_to_ptr.hbm [resolvable:$true] %s31
      %s33 = sshll.u32 [#allocation5], 4
      %s34 = int_to_ptr.vmem [resolvable:$true] %s33
      %39 = dma.hbm_to_vmem [thread:$0]  %s32, 2048, %s34, [#allocation6], 128, 128, 8
    $region9: #{tpu_custom_call.1} parent=1 // pred_fallthru
      _
    // Predicated region
    $region10: #{tpu_custom_call.1} parent=1 // pred_check
      _
    $region11: #{tpu_custom_call.1} parent=1 // pred_check_branch
      %41 = sbr.rel (0) target = $region13
    $region12: #{tpu_custom_call.1} parent=1 // pred_region
      _
    $region13: #{tpu_custom_call.1} parent=1 // pred_fallthru
      _
    // Predicated region
    $region14: #{tpu_custom_call.1} parent=1 // pred_check
      _
    $region15: #{tpu_custom_call.1} parent=1 // pred_check_branch
      %43 = sbr.rel (0) target = $region17
    $region16: #{tpu_custom_call.1} parent=1 // pred_region
      %45 = vsyncadd [#allocation6], 0
      %s46 = sshll.u32 %s3, 4
      %s47 = int_to_ptr.hbm [resolvable:$true] %s46
      %s48 = sshll.u32 [#allocation7], 4
      %s49 = int_to_ptr.vmem [resolvable:$true] %s48
      %54 = dma.hbm_to_vmem [thread:$0]  %s47, 2048, %s49, [#allocation6], 128, 128, 8
    $region17: #{tpu_custom_call.1} parent=1 // pred_fallthru
      _
    // Predicated region
    $region18: #{tpu_custom_call.1} parent=1 // pred_check
      _
    $region19: #{tpu_custom_call.1} parent=1 // pred_check_branch
      %56 = sbr.rel (0) target = $region21
    $region20: #{tpu_custom_call.1} parent=1 // pred_region
      _
    $region21: #{tpu_custom_call.1} parent=1 // pred_fallthru
      _
    // Predicated region
    $region22: #{tpu_custom_call.1} parent=1 // pred_check
      _
    $region23: #{tpu_custom_call.1} parent=1 // pred_check_branch
      %58 = sbr.rel (0) target = $region25
    $region24: #{tpu_custom_call.1} parent=1 // pred_region
      %60 = vsyncadd [#allocation9], 0
      %s61 = sshll.u32 %s5, 4
      %s62 = int_to_ptr.hbm [resolvable:$true] %s61
      %s63 = sshll.u32 [#allocation8], 4
      %s64 = int_to_ptr.vmem [resolvable:$true] %s63
      %69 = dma.hbm_to_vmem [thread:$0]  %s62, 2048, %s64, [#allocation9], 128, 128, 8
    $region25: #{tpu_custom_call.1} parent=1 // pred_fallthru
      _
    // Predicated region
    $region26: #{tpu_custom_call.1} parent=1 // pred_check
      _
    $region27: #{tpu_custom_call.1} parent=1 // pred_check_branch
      %71 = sbr.rel (0) target = $region29
    $region28: #{tpu_custom_call.1} parent=1 // pred_region
      _
    $region29: #{tpu_custom_call.1} parent=1 // pred_fallthru
      _
    // Predicated region
    $region30: #{tpu_custom_call.1} parent=1 // pred_check
      _
    $region31: #{tpu_custom_call.1} parent=1 // pred_check_branch
      %73 = sbr.rel (0) target = $region33
    $region32: #{tpu_custom_call.1} parent=1 // pred_region
      %75 = dma.done [#allocation3], 128
    $region33: #{tpu_custom_call.1} parent=1 // pred_fallthru
      _
    // Predicated region
    $region34: #{tpu_custom_call.1} parent=1 // pred_check
      _
    $region35: #{tpu_custom_call.1} parent=1 // pred_check_branch
      %77 = sbr.rel (0) target = $region37
    $region36: #{tpu_custom_call.1} parent=1 // pred_region
      %79 = dma.done [#allocation6], 2048
    $region37: #{tpu_custom_call.1} parent=1 // pred_fallthru
      _
    // Predicated region
    $region38: #{tpu_custom_call.1} parent=1 // pred_check
      _
    $region39: #{tpu_custom_call.1} parent=1 // pred_check_branch
      %81 = sbr.rel (0) target = $region41
    $region40: #{tpu_custom_call.1} parent=1 // pred_region
      %83 = dma.done [#allocation6], 2048
    $region41: #{tpu_custom_call.1} parent=1 // pred_fallthru
      _
    // Predicated region
    $region42: #{tpu_custom_call.1} parent=1 // pred_check
      _
    $region43: #{tpu_custom_call.1} parent=1 // pred_check_branch
      %85 = sbr.rel (0) target = $region45
    $region44: #{tpu_custom_call.1} parent=1 // pred_region
      %87 = dma.done [#allocation9], 2048
    $region45: #{tpu_custom_call.1} parent=1 // pred_fallthru
      _
    %v88 = vld [vmem:[#allocation2] sm:$0xff]
    %v89 = vld [vmem:[#allocation5] sm:$0xff]
    %v90 = vld [vmem:[#allocation5 + $0x8] sm:$0xff]
    %v91 = vld [vmem:[#allocation5 + $0x10] sm:$0xff]
    %v92 = vld [vmem:[#allocation5 + $0x18] sm:$0xff]
    %v93 = vld [vmem:[#allocation5 + $0x20] sm:$0xff]
    %v94 = vld [vmem:[#allocation5 + $0x28] sm:$0xff]
    %v95 = vld [vmem:[#allocation5 + $0x30] sm:$0xff]
    %v96 = vld [vmem:[#allocation5 + $0x38] sm:$0xff]
    %v97 = vld [vmem:[#allocation5 + $0x40] sm:$0xff]
    %v98 = vld [vmem:[#allocation5 + $0x48] sm:$0xff]
    %v99 = vld [vmem:[#allocation5 + $0x50] sm:$0xff]
    %v100 = vld [vmem:[#allocation5 + $0x58] sm:$0xff]
    %v101 = vld [vmem:[#allocation5 + $0x60] sm:$0xff]
    %v102 = vld [vmem:[#allocation5 + $0x68] sm:$0xff]
    %v103 = vld [vmem:[#allocation5 + $0x70] sm:$0xff]
    %v104 = vld [vmem:[#allocation5 + $0x78] sm:$0xff]
    %v105 = vld [vmem:[%s2] sm:$0x1]
    %v107 = vperm.slane %v105, 0
    %109 = vmatpush.msra.mxu0 %v104
    %110 = vmatpush.msra.mxu0 %v103
    %111 = vmatpush.msra.mxu0 %v102
    %112 = vmatpush.msra.mxu0 %v101
    %113 = vmatpush.msra.mxu0 %v100
    %114 = vmatpush.msra.mxu0 %v99
    %115 = vmatpush.msra.mxu0 %v98
    %116 = vmatpush.msra.mxu0 %v97
    %117 = vmatpush.msra.mxu0 %v96
    %118 = vmatpush.msra.mxu0 %v95
    %119 = vmatpush.msra.mxu0 %v94
    %120 = vmatpush.msra.mxu0 %v93
    %121 = vmatpush.msra.mxu0 %v92
    %122 = vmatpush.msra.mxu0 %v91
    %123 = vmatpush.msra.mxu0 %v90
    %124 = vmatpush.msra.mxu0 %v89
    %125 = vmatmul.f32.gmra.mxu0 %v88
    %v126 = vpop.f32.mrf.mxu0
    %v127 = vadd.f32 %v107, %v126
    %128 = vdwg.mxu0
    %v129 = vmax.f32 %v127, 0.0
    %v130 = vld [vmem:[#allocation7] sm:$0xff]
    %v131 = vld [vmem:[#allocation7 + $0x8] sm:$0xff]
    %v132 = vld [vmem:[#allocation7 + $0x10] sm:$0xff]
    %v133 = vld [vmem:[#allocation7 + $0x18] sm:$0xff]
    %v134 = vld [vmem:[#allocation7 + $0x20] sm:$0xff]
    %v135 = vld [vmem:[#allocation7 + $0x28] sm:$0xff]
    %v136 = vld [vmem:[#allocation7 + $0x30] sm:$0xff]
    %v137 = vld [vmem:[#allocation7 + $0x38] sm:$0xff]
    %v138 = vld [vmem:[#allocation7 + $0x40] sm:$0xff]
    %v139 = vld [vmem:[#allocation7 + $0x48] sm:$0xff]
    %v140 = vld [vmem:[#allocation7 + $0x50] sm:$0xff]
    %v141 = vld [vmem:[#allocation7 + $0x58] sm:$0xff]
    %v142 = vld [vmem:[#allocation7 + $0x60] sm:$0xff]
    %v143 = vld [vmem:[#allocation7 + $0x68] sm:$0xff]
    %v144 = vld [vmem:[#allocation7 + $0x70] sm:$0xff]
    %v145 = vld [vmem:[#allocation7 + $0x78] sm:$0xff]
    %v146 = vld [vmem:[%s4] sm:$0x1]
    %v148 = vperm.slane %v146, 0
    %150 = vmatpush.msra.mxu0 %v145
    %151 = vmatpush.msra.mxu0 %v144
    %152 = vmatpush.msra.mxu0 %v143
    %153 = vmatpush.msra.mxu0 %v142
    %154 = vmatpush.msra.mxu0 %v141
    %155 = vmatpush.msra.mxu0 %v140
    %156 = vmatpush.msra.mxu0 %v139
    %157 = vmatpush.msra.mxu0 %v138
    %158 = vmatpush.msra.mxu0 %v137
    %159 = vmatpush.msra.mxu0 %v136
    %160 = vmatpush.msra.mxu0 %v135
    %161 = vmatpush.msra.mxu0 %v134
    %162 = vmatpush.msra.mxu0 %v133
    %163 = vmatpush.msra.mxu0 %v132
    %164 = vmatpush.msra.mxu0 %v131
    %165 = vmatpush.msra.mxu0 %v130
    %166 = vmatmul.f32.gmra.mxu0 %v129
    %v167 = vpop.f32.mrf.mxu0
    %v168 = vadd.f32 %v148, %v167
    %169 = vdwg.mxu0
    %v170 = vmax.f32 %v168, 0.0
    %v171 = vld [vmem:[#allocation8] sm:$0xff]
    %v172 = vld [vmem:[#allocation8 + $0x8] sm:$0xff]
    %v173 = vld [vmem:[#allocation8 + $0x10] sm:$0xff]
    %v174 = vld [vmem:[#allocation8 + $0x18] sm:$0xff]
    %v175 = vld [vmem:[#allocation8 + $0x20] sm:$0xff]
    %v176 = vld [vmem:[#allocation8 + $0x28] sm:$0xff]
    %v177 = vld [vmem:[#allocation8 + $0x30] sm:$0xff]
    %v178 = vld [vmem:[#allocation8 + $0x38] sm:$0xff]
    %v179 = vld [vmem:[#allocation8 + $0x40] sm:$0xff]
    %v180 = vld [vmem:[#allocation8 + $0x48] sm:$0xff]
    %v181 = vld [vmem:[#allocation8 + $0x50] sm:$0xff]
    %v182 = vld [vmem:[#allocation8 + $0x58] sm:$0xff]
    %v183 = vld [vmem:[#allocation8 + $0x60] sm:$0xff]
    %v184 = vld [vmem:[#allocation8 + $0x68] sm:$0xff]
    %v185 = vld [vmem:[#allocation8 + $0x70] sm:$0xff]
    %v186 = vld [vmem:[#allocation8 + $0x78] sm:$0xff]
    %v187 = vld [vmem:[%s6] sm:$0x1]
    %v189 = vperm.slane %v187, 0
    %191 = vmatpush.msra.mxu0 %v186
    %192 = vmatpush.msra.mxu0 %v185
    %193 = vmatpush.msra.mxu0 %v184
    %194 = vmatpush.msra.mxu0 %v183
    %195 = vmatpush.msra.mxu0 %v182
    %196 = vmatpush.msra.mxu0 %v181
    %197 = vmatpush.msra.mxu0 %v180
    %198 = vmatpush.msra.mxu0 %v179
    %199 = vmatpush.msra.mxu0 %v178
    %200 = vmatpush.msra.mxu0 %v177
    %201 = vmatpush.msra.mxu0 %v176
    %202 = vmatpush.msra.mxu0 %v175
    %203 = vmatpush.msra.mxu0 %v174
    %204 = vmatpush.msra.mxu0 %v173
    %205 = vmatpush.msra.mxu0 %v172
    %206 = vmatpush.msra.mxu0 %v171
    %207 = vmatmul.f32.gmra.mxu0 %v170
    %v208 = vpop.f32.mrf.mxu0
    %v209 = vadd.f32 %v189, %v208
    %210 = vdwg.mxu0
    %211 = vmax.xlane.f32.xlu0 %v209
    %v212 = vpop.xlane.xlu0 %211
    %v213 = vsub.f32 %v209, %v212
    %v214 = vmul.f32 %v213, 1.442695
    %v215 = vpow.pop %v214
    %216 = vadd.xlane.f32.xlu0 %v215
    %v217 = vpop.xlane.xlu0 %216
    %v218 = vlog2.pop %v217
    %v219 = vmul.f32 %v218, 0.6931472
    %v220 = vsub.f32 %v213, %v219
    %221 = vst [vmem:[#allocation10] sm:$0xff] %v220
    // Predicated region
    $region46: #{tpu_custom_call.1} parent=1 // pred_check
      _
    $region47: #{tpu_custom_call.1} parent=1 // pred_check_branch
      %223 = sbr.rel (0) target = $region49
    $region48: #{tpu_custom_call.1} parent=1 // pred_region
      %225 = vsyncadd [#allocation4], 0
      %s227 = sshll.u32 [#allocation10], 4
      %s228 = int_to_ptr.vmem [resolvable:$true] %s227
      %s229 = sshll.u32 %s7, 4
      %s230 = int_to_ptr.hbm [resolvable:$true] %s229
      %232 = dma.vmem_to_hbm [thread:$0]  %s228, 128, %s230, [#allocation4]
    $region49: #{tpu_custom_call.1} parent=1 // pred_fallthru
      _
    // Predicated region
    $region50: #{tpu_custom_call.1} parent=1 // pred_check
      _
    $region51: #{tpu_custom_call.1} parent=1 // pred_check_branch
      %234 = sbr.rel (0) target = $region53
    $region52: #{tpu_custom_call.1} parent=1 // pred_region
      %236 = dma.done [#allocation4], 128
    $region53: #{tpu_custom_call.1} parent=1 // pred_fallthru
      _
    %237 = vsyncpa [#allocation3], 1
    %238 = vsyncpa [#allocation6], 1
    %239 = vsyncpa [#allocation9], 1
    %240 = vsyncpa [#allocation4], 1

</llo_original>
